<compile_context>
chip_gen: v5e
topology: v5e:2x2
jax: 0.10.0
libtpu: 0.0.40
codegen_flags: <defaults>
</compile_context>

<pallas_src>
import functools

import jax
import jax.numpy as jnp
from jax.experimental import pallas as pl
from jax.experimental.pallas import tpu as pltpu


_B_RESIDENT_BUDGET = 4 * 1024 * 1024   # x / support kept VMEM-resident below this
_W_RESIDENT_BUDGET = 4 * 1024 * 1024   # weight kept VMEM-resident below this


def _round_up(x, m):
    return ((x + m - 1) // m) * m


def _pick_tile(padded_dim, tile_max, quantum):
    """Largest multiple of `quantum` that divides `padded_dim` and is <= tile_max."""
    tile_max = max(quantum, min(tile_max, padded_dim))
    best = quantum
    for t in range(quantum, tile_max + 1, quantum):
        if padded_dim % t == 0:
            best = t
    return best


def _pad2(a, rows, cols):
    pr, pc = rows - a.shape[0], cols - a.shape[1]
    if pr == 0 and pc == 0:
        return a
    return jnp.pad(a, ((0, pr), (0, pc)))


def _cast(a, dtype):
    return a if a.dtype == dtype else a.astype(dtype)


def _make_ax_w_kernel(tk, b_resident):
    """output_tile = (sum_k adj_tile @ x_tile) @ W   (W VMEM-resident)."""
    def kernel(adj_ref, x_ref, w_ref, out_ref, acc_ref):
        k = pl.program_id(1)

        @pl.when(k == 0)
        def _init():
            acc_ref[...] = jnp.zeros_like(acc_ref)

        if b_resident:
            start = pl.multiple_of(k * tk, 128)
            x_blk = x_ref[pl.ds(start, tk), :]
        else:
            x_blk = x_ref[...]
        acc_ref[...] += jnp.dot(adj_ref[...], x_blk,
                                preferred_element_type=jnp.float32)

        @pl.when(k == pl.num_programs(1) - 1)
        def _finalize():
            # Keep the accumulator in f32; cast W up instead of acc down.
            out_ref[...] = jnp.dot(
                acc_ref[...], w_ref[...].astype(jnp.float32),
                preferred_element_type=jnp.float32).astype(out_ref.dtype)

    return kernel


def _make_adj_b_kernel(tk, b_resident):
    """output_tile = sum_k adj_tile @ support_tile   (support precomputed)."""
    def kernel(adj_ref, b_ref, out_ref, acc_ref):
        k = pl.program_id(1)

        @pl.when(k == 0)
        def _init():
            acc_ref[...] = jnp.zeros_like(acc_ref)

        if b_resident:
            start = pl.multiple_of(k * tk, 128)
            b_blk = b_ref[pl.ds(start, tk), :]
        else:
            b_blk = b_ref[...]
        acc_ref[...] += jnp.dot(adj_ref[...], b_blk,
                                preferred_element_type=jnp.float32)

        @pl.when(k == pl.num_programs(1) - 1)
        def _finalize():
            out_ref[...] = acc_ref[...].astype(out_ref.dtype)

    return kernel


def gcn_layer(x, adj, weight, *, tm_max=512, tk_max=512, compute_dtype=None,
              b_vmem_budget=_B_RESIDENT_BUDGET):
    """GCN layer forward: adj @ (x @ weight), fused tiled Pallas TPU kernel.

    compute_dtype: operand dtype for the kernel (accumulation is always f32).
      Pass jnp.bfloat16 for large graphs; for multi-layer reuse, pre-cast and
      pre-pad adj once outside this function so the cast is amortized.
    """
    N, F_in = x.shape
    F_in2, F_out = weight.shape
    assert F_in == F_in2
    assert adj.shape == (N, N)

    out_dtype = x.dtype
    cdt = jnp.dtype(compute_dtype) if compute_dtype is not None else jnp.dtype(x.dtype)
    el = cdt.itemsize
    out_el = jnp.dtype(out_dtype).itemsize

    # Padding: rows only to the sublane quantum, adj columns (lane dim) to 128.
    sub = 16 if el == 2 else 8
    f_in_p = _round_up(F_in, 128)
    f_out_p = _round_up(F_out, 128)
    n_rows_p = _round_up(N, sub)
    n_cols_p = _round_up(N, 128)

    # Tiles: divisors of the padded dims (no pad-to-tile inflation).
    tm = _pick_tile(n_rows_p, tm_max, sub)
    if n_rows_p // tm < 2 and n_rows_p >= 2 * sub:
        # Keep >= 2 row tiles so the "parallel" axis feeds both v7x TensorCores.
        tm = _pick_tile(n_rows_p, n_rows_p // 2, sub)
    tk = _pick_tile(n_cols_p, tk_max, 128)

    # Associativity: carry the narrower (padded) feature dim through the N^2
    # contraction.  Path A ((adj@x)@W) keeps W VMEM-resident; only take it
    # when W is small enough.
    w_bytes = f_in_p * f_out_p * el
    use_ax_w = (f_in_p <= f_out_p) and (w_bytes <= _W_RESIDENT_BUDGET)
    # TODO(synk): for very wide path-A weights, tile F_out with a third grid
    # axis instead of falling back to path B (matters on v7x's 64 MiB VMEM).

    adj_p = _cast(_pad2(adj, n_rows_p, n_cols_p), cdt)

    if use_ax_w:
        b = _cast(_pad2(x, n_cols_p, f_in_p), cdt)            # kernel contracts adj @ x
        w_p = _cast(_pad2(weight, f_in_p, f_out_p), cdt)
        b_width = f_in_p
        acc_width = f_in_p
    else:
        # Hoist support = x @ W out of the reduction loop entirely.
        support = jnp.dot(x.astype(jnp.float32), weight.astype(jnp.float32),
                          preferred_element_type=jnp.float32)
        b = _cast(_pad2(support, n_cols_p, f_out_p), cdt)
        w_p = None
        b_width = f_out_p
        acc_width = f_out_p

    # Keep b (x or support) fully VMEM-resident when small: DMA'd once total
    # instead of once per row tile.
    b_bytes = n_cols_p * b_width * el
    b_resident = b_bytes <= b_vmem_budget

    grid = (n_rows_p // tm, n_cols_p // tk)
    n_row_tiles = grid[0]

    adj_spec = pl.BlockSpec((tm, tk), lambda i, k: (i, k))
    if b_resident:
        b_spec = pl.BlockSpec((n_cols_p, b_width), lambda i, k: (0, 0))
    else:
        b_spec = pl.BlockSpec((tk, b_width), lambda i, k: (k, 0))
    out_spec = pl.BlockSpec((tm, f_out_p), lambda i, k: (i, 0))

    if use_ax_w:
        kernel = _make_ax_w_kernel(tk, b_resident)
        in_specs = [adj_spec, b_spec,
                    pl.BlockSpec((f_in_p, f_out_p), lambda i, k: (0, 0))]
        operands = (adj_p, b, w_p)
        flops = (2 * n_rows_p * n_cols_p * f_in_p
                 + 2 * n_rows_p * f_in_p * f_out_p)
        bytes_accessed = (adj_p.size * el
                          + b.size * el * (1 if b_resident else n_row_tiles)
                          + w_p.size * el
                          + n_rows_p * f_out_p * out_el)
    else:
        kernel = _make_adj_b_kernel(tk, b_resident)
        in_specs = [adj_spec, b_spec]
        operands = (adj_p, b)
        flops = 2 * n_rows_p * n_cols_p * f_out_p
        bytes_accessed = (adj_p.size * el
                          + b.size * el * (1 if b_resident else n_row_tiles)
                          + n_rows_p * f_out_p * out_el)

    # Scoped-VMEM budget: double-buffered streamed blocks + resident blocks +
    # accumulator.  Raise the v5e 16 MiB default; cap at v7x's 64 MiB physical.
    vmem_est = (2 * tm * tk * el
                + (2 * b_bytes if b_resident else 2 * tk * b_width * el)
                + (2 * w_bytes if use_ax_w else 0)
                + 2 * tm * f_out_p * out_el
                + tm * acc_width * 4)
    vmem_limit = int(min(64 * 1024 * 1024, max(32 * 1024 * 1024, 2 * vmem_est)))

    cost = pl.CostEstimate(flops=flops, transcendentals=0,
                           bytes_accessed=bytes_accessed)

    out_p = pl.pallas_call(
        kernel,
        out_shape=jax.ShapeDtypeStruct((n_rows_p, f_out_p), out_dtype),
        grid_spec=pltpu.PrefetchScalarGridSpec(
            num_scalar_prefetch=0,
            grid=grid,
            in_specs=in_specs,
            out_specs=out_spec,
            scratch_shapes=[pltpu.VMEM((tm, acc_width), jnp.float32)],
        ),
        compiler_params=pltpu.CompilerParams(
            dimension_semantics=("parallel", "arbitrary"),
            vmem_limit_bytes=vmem_limit),
        cost_estimate=cost,
    )(*operands)

    # Slice the zero-padding back off.
    return out_p[:N, :F_out]


if __name__ == "__main__":
    key = jax.random.PRNGKey(0)
    keys = jax.random.split(key, 9)

    def make_case(kw, kx, ka, n, fi, fo):
        # reset_parameters(): uniform(-stdv, stdv), stdv = 1/sqrt(out_features)
        stdv = 1.0 / (fo ** 0.5)
        w = jax.random.uniform(kw, (fi, fo), dtype=jnp.float32,
                               minval=-stdv, maxval=stdv)
        xx = jax.random.normal(kx, (n, fi), dtype=jnp.float32)
        aa = jax.random.uniform(ka, (n, n), dtype=jnp.float32)
        return xx, aa, w

    # --- Toy shapes consistent with the module (path A, resident x) ----------
    x, adj, weight = make_case(keys[0], keys[1], keys[2], 16, 32, 64)
    out = jax.block_until_ready(gcn_layer(x, adj, weight))
    ref = adj @ (x @ weight)
    assert out.shape == (16, 64)
    assert jnp.allclose(out, ref, atol=1e-4, rtol=1e-4), "toy-shape mismatch"

    # --- Ragged N (path B: precomputed support, resident) ---------------------
    x2, adj2, weight2 = make_case(keys[3], keys[4], keys[5], 260, 200, 64)
    out2 = jax.block_until_ready(gcn_layer(x2, adj2, weight2))
    ref2 = adj2 @ (x2 @ weight2)
    assert out2.shape == (260, 64)
    assert jnp.allclose(out2, ref2, rtol=1e-3, atol=1e-3), "ragged-N mismatch"

    # --- Multi-tile reduction axis (path A, resident and streamed variants) ---
    x3, adj3, weight3 = make_case(keys[6], keys[7], keys[8], 640, 96, 160)
    ref3 = adj3 @ (x3 @ weight3)
    out3 = jax.block_until_ready(gcn_layer(x3, adj3, weight3))
    assert out3.shape == (640, 160)
    assert jnp.allclose(out3, ref3, rtol=1e-3, atol=1e-2), "multi-tile mismatch"
    # Force the streamed-b code path as well (budget=0 -> never resident).
    out3s = jax.block_until_ready(gcn_layer(x3, adj3, weight3, b_vmem_budget=0))
    assert jnp.allclose(out3s, ref3, rtol=1e-3, atol=1e-2), "streamed-b mismatch"

    print("KERNEL_OK")
</pallas_src>

<mosaic_0001>
module attributes {stable_mosaic.version = 11 : i64} {
  func.func @kernel(%arg0: i32, %arg1: i32, %arg2: memref<8x128xf32, #tpu.memory_space<vmem>>, %arg3: memref<128x128xf32, #tpu.memory_space<vmem>>, %arg4: memref<128x128xf32, #tpu.memory_space<vmem>>, %arg5: memref<8x128xf32, #tpu.memory_space<vmem>>, %arg6: memref<8x128xf32, #tpu.memory_space<vmem>>) attributes {dimension_semantics = [#tpu.dimension_semantics<parallel>, #tpu.dimension_semantics<arbitrary>], iteration_bounds = array<i64: 2, 1>, scalar_prefetch = 0 : i64, scratch_operands = 1 : i64, tpu.core_type = #tpu.core_type<tc>, window_params = [{transform_indices = @transform_0, window_bounds = array<i64: 8, 128>}, {pipeline_mode = #tpu.pipeline_mode<synchronous>, transform_indices = @transform_1, window_bounds = array<i64: 128, 128>}, {pipeline_mode = #tpu.pipeline_mode<synchronous>, transform_indices = @transform_2, window_bounds = array<i64: 128, 128>}, {transform_indices = @transform_3, window_bounds = array<i64: 8, 128>}]} {
    %c0_i32 = arith.constant 0 : i32
    %0 = arith.cmpi eq, %arg1, %c0_i32 : i32
    %1 = arith.extui %0 : i1 to i32
    %c0_i32_0 = arith.constant 0 : i32
    %2 = arith.cmpi ne, %1, %c0_i32_0 : i32
    scf.if %2 {
      %cst_9 = arith.constant 0.000000e+00 : f32
      %15 = vector.broadcast %cst_9 : f32 to vector<8x128xf32>
      %c0_10 = arith.constant 0 : index
      %c0_11 = arith.constant 0 : index
      %16 = vector.load %arg6[%c0_10, %c0_11] : memref<8x128xf32, #tpu.memory_space<vmem>>, vector<8x128xf32>
      tpu.vector_store %arg6[%c0_10, %c0_11], %15 {strides = array<i32>} : memref<8x128xf32, #tpu.memory_space<vmem>>, vector<8x128xf32>,
    } else {
    }
    %c128_i32 = arith.constant 128 : i32
    %3 = arith.muli %arg1, %c128_i32 : i32
    %4 = tpu.assume_multiple %3, 128 : i32
    %5 = arith.index_cast %4 : i32 to index
    %c0 = arith.constant 0 : index
    %6 = vector.load %arg3[%5, %c0] : memref<128x128xf32, #tpu.memory_space<vmem>>, vector<128x128xf32>
    %c0_1 = arith.constant 0 : index
    %c0_2 = arith.constant 0 : index
    %7 = vector.load %arg6[%c0_1, %c0_2] : memref<8x128xf32, #tpu.memory_space<vmem>>, vector<8x128xf32>
    %c0_3 = arith.constant 0 : index
    %c0_4 = arith.constant 0 : index
    %8 = vector.load %arg2[%c0_3, %c0_4] : memref<8x128xf32, #tpu.memory_space<vmem>>, vector<8x128xf32>
    %cst = arith.constant dense<0.000000e+00> : vector<8x128xf32>
    %9 = tpu.matmul %8, %6, %cst {dimension_numbers = #tpu.dot_dimension_numbers<[1], [0], [0], [1], [0, 0, 1, 1], [], []>} : vector<8x128xf32>, vector<128x128xf32>, vector<8x128xf32> -> vector<8x128xf32>
    %10 = arith.addf %7, %9 : vector<8x128xf32>
    %c0_5 = arith.constant 0 : index
    %c0_6 = arith.constant 0 : index
    %11 = vector.load %arg6[%c0_5, %c0_6] : memref<8x128xf32, #tpu.memory_space<vmem>>, vector<8x128xf32>
    tpu.vector_store %arg6[%c0_5, %c0_6], %10 {strides = array<i32>} : memref<8x128xf32, #tpu.memory_space<vmem>>, vector<8x128xf32>,
    %c0_i32_7 = arith.constant 0 : i32
    %12 = arith.cmpi eq, %arg1, %c0_i32_7 : i32
    %13 = arith.extui %12 : i1 to i32
    %c0_i32_8 = arith.constant 0 : i32
    %14 = arith.cmpi ne, %13, %c0_i32_8 : i32
    scf.if %14 {
      %c0_9 = arith.constant 0 : index
      %c0_10 = arith.constant 0 : index
      %15 = vector.load %arg6[%c0_9, %c0_10] : memref<8x128xf32, #tpu.memory_space<vmem>>, vector<8x128xf32>
      %c0_11 = arith.constant 0 : index
      %c0_12 = arith.constant 0 : index
      %16 = vector.load %arg4[%c0_11, %c0_12] : memref<128x128xf32, #tpu.memory_space<vmem>>, vector<128x128xf32>
      %cst_13 = arith.constant dense<0.000000e+00> : vector<8x128xf32>
      %17 = tpu.matmul %15, %16, %cst_13 {dimension_numbers = #tpu.dot_dimension_numbers<[1], [0], [0], [1], [0, 0, 1, 1], [], []>} : vector<8x128xf32>, vector<128x128xf32>, vector<8x128xf32> -> vector<8x128xf32>
      %c0_14 = arith.constant 0 : index
      %c0_15 = arith.constant 0 : index
      %18 = vector.load %arg5[%c0_14, %c0_15] : memref<8x128xf32, #tpu.memory_space<vmem>>, vector<8x128xf32>
      tpu.vector_store %arg5[%c0_14, %c0_15], %17 {strides = array<i32>} : memref<8x128xf32, #tpu.memory_space<vmem>>, vector<8x128xf32>,
    } else {
    }
    return
  }
  func.func @transform_0(%arg0: i32, %arg1: i32) -> (i32, i32) {
    %c0_i32 = arith.constant 0 : i32
    return %arg0, %arg1 : i32, i32
  }
  func.func @transform_1(%arg0: i32, %arg1: i32) -> (i32, i32) {
    %c0_i32 = arith.constant 0 : i32
    %c0_i32_0 = arith.constant 0 : i32
    %c0_i32_1 = arith.constant 0 : i32
    return %c0_i32, %c0_i32_0 : i32, i32
  }
  func.func @transform_2(%arg0: i32, %arg1: i32) -> (i32, i32) {
    %c0_i32 = arith.constant 0 : i32
    %c0_i32_0 = arith.constant 0 : i32
    %c0_i32_1 = arith.constant 0 : i32
    return %c0_i32, %c0_i32_0 : i32, i32
  }
  func.func @transform_3(%arg0: i32, %arg1: i32) -> (i32, i32) {
    %c0_i32 = arith.constant 0 : i32
    %c0_i32_0 = arith.constant 0 : i32
    return %arg0, %c0_i32 : i32, i32
  }
}

</mosaic_0001>

<llo_original>
// kernel: tpu_custom_call.1
$region0: #{tpu_custom_call.1}
  #allocation0 [shape = 'u32[]', space=smem, size = 0x4, offset = 0x4, fixed_abs, tag = 'smem constant byte address 0x4 - core index']
  #allocation1 [shape = 'u32[72,128]{1,0:T(1,128)}', space=vmem, size = 0x9000, scoped, tag = 'internal scratch']
  #allocation2 [shape = 'f32[8,128]{1,0:T(8,128)}', space=vmem, size = 0x1000, scoped, tag = 'scratch operand']
  %s0 = inlined_call_operand.hbm [shape: f32[16,128], index: 0, kind: input, shape index: {}]
  %s1 = inlined_call_operand.hbm [shape: f32[128,128], index: 1, kind: input, shape index: {}]
  %s2 = inlined_call_operand.hbm [shape: f32[128,128], index: 2, kind: input, shape index: {}]
  %s3 = inlined_call_operand.hbm [shape: f32[16,128], index: 3, kind: output, shape index: {}]
  %s4 = sld [smem:[#allocation0]]
  $region65: #{tpu_custom_call.1} parent=0
    _
  %s6 = ssub.s32 1, %s4
  %s7 = scalar_select 0, %s6, %s4
  $region1: #{tpu_custom_call.1} parent=0
    #allocation3 [shape = 'u8[8192]{0}', space=vmem, size = 0x2000, scoped, tag = 'input window, operand 0']
    #allocation4 [shape = 's32[2]{0}', space=sflag, size = 0x8, scoped, tag = 'scoped memory for tpu_custom_call.1']
    #allocation5 [shape = 's32[2]{0}', space=sflag, size = 0x8, scoped, tag = 'scoped memory for tpu_custom_call.1']
    #allocation6 [shape = 'u8[65536]{0}', space=vmem, size = 0x10000, scoped, tag = 'input window, operand 1, single buffered']
    #allocation7 [shape = 's32[1]{0}', space=sflag, size = 0x4, scoped, tag = 'scoped memory for tpu_custom_call.1']
    #allocation8 [shape = 'u8[65536]{0}', space=vmem, size = 0x10000, scoped, tag = 'input window, operand 2, single buffered']
    #allocation9 [shape = 'u8[8192]{0}', space=vmem, size = 0x2000, scoped, tag = 'output window, operand 0']
    %8 = vsyncpa [#allocation4], 0
    %s9 = scalar_lea.sflag [#allocation4], 1
    %10 = vsyncpa %s9, 0
    %11 = vsyncpa [#allocation7], 0
    %12 = vsyncpa [#allocation5], 0
    %s13 = scalar_lea.sflag [#allocation5], 1
    %14 = vsyncpa %s13, 0
    loop: start=0, step=1, limit=4
    $region2: #{tpu_custom_call.1} parent=1 // loop_pre_header
      _
    $region3: #{tpu_custom_call.1} parent=1 // loop_header
      %s16 = sphi 0, %s20
      %p17 = scmp.ge.s32.totalorder %s16, 4
      %s23 = sphi 0, %s35
      %s24 = sphi 0, %s31
      %s25 = sphi 0, %s23
      %s26 = sphi 0, %s24
      %s27 = sphi 0, %s25
      %s28 = sphi 0, %s26
      %s40 = sphi 0, %s42
      %s43 = sphi 0, %s40
      %s44 = sphi 0, %s43
      %s60 = sphi 0, %s44
      %s64 = sphi 0, %s64
      %s66 = sphi 0, %s64
      %s67 = sphi 0, %s66
      %s81 = sphi 0, %s67
      %s85 = sphi 0, %s85
      %s87 = sphi 0, %s85
      %s88 = sphi 0, %s87
      %s102 = sphi 0, %s88
      %s108 = sphi 0, %s110
      %s111 = sphi 0, %s108
      %s112 = sphi 0, %s111
      %s128 = sphi 0, %s112
    $region4: #{tpu_custom_call.1} parent=1 // loop_header_branch
      %19 = sbr.rel (%p17) target = $region8
    $region5: #{tpu_custom_call.1} parent=1 // loop_body
      %s21 = ssub.s32 %s16, 1
      %s22 = ssub.s32 %s16, 2
      %s29 = sadd.s32 1, %s24
      %p30 = scmp.ge.s32.totalorder %s29, 1
      %s31 = scalar_select %p30, 0, %s29
      %s32 = sadd.s32 1, %s23
      %s33 = scalar_select %p30, %s32, %s23
      %p34 = scmp.ge.s32.totalorder %s33, 2
      %s35 = scalar_select %p34, 0, %s33
      %s36 = ssub.s32 %s23, %s35
      %s37 = ssub.s32 %s24, %s31
      %s38 = sor.u32 %s36, %s37
      %p39 = scmp.eq.s32.totalorder %s38, 0
      %s41 = sadd.s32 %s40, 1
      %s42 = scalar_select %p39, %s40, %s41
      %p45 = pneg %p39
      %p46 = scmp.eq.s32.totalorder %s16, 1
      %p47 = por %p45, %p46
      %p48 = scmp.ne.s32.totalorder %s40, %s43
      %p49 = scmp.eq.s32.totalorder %s16, 0
      %p50 = por %p48, %p49
      %p51 = scmp.ne.s32.totalorder %s40, %s43
      %p52 = scmp.eq.s32.totalorder %s21, 1
      %p53 = por %p51, %p52
      %p54 = scmp.ne.s32.totalorder %s43, %s44
      %p55 = scmp.eq.s32.totalorder %s21, 0
      %p56 = por %p54, %p55
      %p57 = scmp.ne.s32.totalorder %s43, %s44
      %p58 = scmp.eq.s32.totalorder %s22, 1
      %p59 = por %p57, %p58
      %p61 = scmp.ne.s32.totalorder %s44, %s60
      %p62 = scmp.eq.s32.totalorder %s22, 0
      %p63 = por %p61, %p62
      %s65 = sadd.s32 %s64, 1
      %p68 = scmp.eq.s32.totalorder %s16, 1
      %p69 = scmp.ne.s32.totalorder %s64, %s66
      %p70 = scmp.eq.s32.totalorder %s16, 0
      %p71 = por %p69, %p70
      %p72 = scmp.ne.s32.totalorder %s64, %s66
      %p73 = scmp.eq.s32.totalorder %s21, 1
      %p74 = por %p72, %p73
      %p75 = scmp.ne.s32.totalorder %s66, %s67
      %p76 = scmp.eq.s32.totalorder %s21, 0
      %p77 = por %p75, %p76
      %p78 = scmp.ne.s32.totalorder %s66, %s67
      %p79 = scmp.eq.s32.totalorder %s22, 1
      %p80 = por %p78, %p79
      %p82 = scmp.ne.s32.totalorder %s67, %s81
      %p83 = scmp.eq.s32.totalorder %s22, 0
      %p84 = por %p82, %p83
      %s86 = sadd.s32 %s85, 1
      %p89 = scmp.eq.s32.totalorder %s16, 1
      %p90 = scmp.ne.s32.totalorder %s85, %s87
      %p91 = scmp.eq.s32.totalorder %s16, 0
      %p92 = por %p90, %p91
      %p93 = scmp.ne.s32.totalorder %s85, %s87
      %p94 = scmp.eq.s32.totalorder %s21, 1
      %p95 = por %p93, %p94
      %p96 = scmp.ne.s32.totalorder %s87, %s88
      %p97 = scmp.eq.s32.totalorder %s21, 0
      %p98 = por %p96, %p97
      %p99 = scmp.ne.s32.totalorder %s87, %s88
      %p100 = scmp.eq.s32.totalorder %s22, 1
      %p101 = por %p99, %p100
      %p103 = scmp.ne.s32.totalorder %s88, %s102
      %p104 = scmp.eq.s32.totalorder %s22, 0
      %p105 = por %p103, %p104
      %s106 = ssub.s32 %s23, %s35
      %p107 = scmp.eq.s32.totalorder %s106, 0
      %s109 = sadd.s32 %s108, 1
      %s110 = scalar_select %p107, %s108, %s109
      %p113 = pneg %p107
      %p114 = scmp.eq.s32.totalorder %s16, 1
      %p115 = por %p113, %p114
      %p116 = scmp.ne.s32.totalorder %s108, %s111
      %p117 = scmp.eq.s32.totalorder %s16, 0
      %p118 = por %p116, %p117
      %p119 = scmp.ne.s32.totalorder %s108, %s111
      %p120 = scmp.eq.s32.totalorder %s21, 1
      %p121 = por %p119, %p120
      %p122 = scmp.ne.s32.totalorder %s111, %s112
      %p123 = scmp.eq.s32.totalorder %s21, 0
      %p124 = por %p122, %p123
      %p125 = scmp.ne.s32.totalorder %s111, %s112
      %p126 = scmp.eq.s32.totalorder %s22, 1
      %p127 = por %p125, %p126
      %p129 = scmp.ne.s32.totalorder %s112, %s128
      %p130 = scmp.eq.s32.totalorder %s22, 0
      %p131 = por %p129, %p130
      %p132 = scmp.le.s32.totalorder 1, %s16
      %p133 = scmp.lt.s32.totalorder %s16, 3
      %p134 = pnand %p132, %p133
      %p135 = pneg %p134
      // Predicated region
      $region9: #{tpu_custom_call.1} parent=5 // pred_check
        _
      $region10: #{tpu_custom_call.1} parent=5 // pred_check_branch
        %137 = sbr.rel (%p134) target = $region12
      $region11: #{tpu_custom_call.1} parent=5 // pred_region
        %s138 = ssub.s32 %s16, 1
        // Predicated region
        $region13: #{tpu_custom_call.1} parent=11 // pred_check
          %p139 = pneg %p77
        $region14: #{tpu_custom_call.1} parent=11 // pred_check_branch
          %141 = sbr.rel (%p139) target = $region16
        $region15: #{tpu_custom_call.1} parent=11 // pred_region
          %143 = vsyncadd [#allocation7], 0
          %s144 = sshll.u32 %s1, 4
          %s145 = int_to_ptr.hbm [resolvable:$true] %s144
          %s146 = sshll.u32 [#allocation6], 4
          %s147 = int_to_ptr.vmem [resolvable:$true] %s146
          %152 = dma.hbm_to_vmem [thread:$0]  %s145, 2048, %s147, [#allocation7], 128, 128, 8
        $region16: #{tpu_custom_call.1} parent=11 // pred_fallthru
          _
        // Predicated region
        $region17: #{tpu_custom_call.1} parent=11 // pred_check
          %p153 = pneg %p98
        $region18: #{tpu_custom_call.1} parent=11 // pred_check_branch
          %155 = sbr.rel (%p153) target = $region20
        $region19: #{tpu_custom_call.1} parent=11 // pred_region
          %157 = vsyncadd [#allocation7], 0
          %s158 = sshll.u32 %s2, 4
          %s159 = int_to_ptr.hbm [resolvable:$true] %s158
          %s160 = sshll.u32 [#allocation8], 4
          %s161 = int_to_ptr.vmem [resolvable:$true] %s160
          %166 = dma.hbm_to_vmem [thread:$0]  %s159, 2048, %s161, [#allocation7], 128, 128, 8
        $region20: #{tpu_custom_call.1} parent=11 // pred_fallthru
          _
      $region12: #{tpu_custom_call.1} parent=5 // pred_fallthru
        _
      %p167 = scmp.lt.s32.totalorder %s16, 2
      // Predicated region
      $region21: #{tpu_custom_call.1} parent=5 // pred_check
        %p168 = pneg %p167
      $region22: #{tpu_custom_call.1} parent=5 // pred_check_branch
        %170 = sbr.rel (%p168) target = $region24
      $region23: #{tpu_custom_call.1} parent=5 // pred_region
        // Predicated region
        $region25: #{tpu_custom_call.1} parent=23 // pred_check
          %p171 = pneg %p50
        $region26: #{tpu_custom_call.1} parent=23 // pred_check_branch
          %173 = sbr.rel (%p171) target = $region28
        $region27: #{tpu_custom_call.1} parent=23 // pred_region
          %s174 = sand.u32 %s40, 1
          %s175 = scalar_lea.sflag [#allocation4], %s174
          %s176 = sand.u32 %s40, 1
          %s177 = smul.addr %s176, 8
          %s178 = scalar_lea.vmem [#allocation3], %s177
          %180 = vsyncadd %s175, 0
          %s181 = sadd.s32 %s24, %s23
          %s182 = smul.addr %s181, 8
          %s183 = scalar_lea.hbm %s0, %s182
          %s185 = sshll.u32 %s183, 4
          %s186 = int_to_ptr.hbm [resolvable:$true] %s185
          %s187 = sshll.u32 %s178, 4
          %s188 = int_to_ptr.vmem [resolvable:$true] %s187
          %190 = dma.hbm_to_vmem [thread:$0]  %s186, 128, %s188, %s175
        $region28: #{tpu_custom_call.1} parent=23 // pred_fallthru
          _
      $region24: #{tpu_custom_call.1} parent=5 // pred_fallthru
        _
      %p191 = scmp.le.s32.totalorder 1, %s16
      %p192 = scmp.lt.s32.totalorder %s16, 3
      %p193 = pnand %p191, %p192
      %p194 = pneg %p193
      // Predicated region
      $region29: #{tpu_custom_call.1} parent=5 // pred_check
        _
      $region30: #{tpu_custom_call.1} parent=5 // pred_check_branch
        %196 = sbr.rel (%p193) target = $region32
      $region31: #{tpu_custom_call.1} parent=5 // pred_region
        %s197 = ssub.s32 %s16, 1
        %s198 = sand.u32 %s43, 1
        %s199 = scalar_lea.sflag [#allocation4], %s198
        %s200 = sand.u32 %s43, 1
        %s201 = smul.addr %s200, 8
        %s202 = scalar_lea.vmem [#allocation3], %s201
        // Predicated region
        $region33: #{tpu_custom_call.1} parent=31 // pred_check
          %p203 = pneg %p56
        $region34: #{tpu_custom_call.1} parent=31 // pred_check_branch
          %205 = sbr.rel (%p203) target = $region36
        $region35: #{tpu_custom_call.1} parent=31 // pred_region
          %207 = dma.done %s199, 128
        $region36: #{tpu_custom_call.1} parent=31 // pred_fallthru
          _
        // Predicated region
        $region37: #{tpu_custom_call.1} parent=31 // pred_check
          %p208 = pneg %p77
        $region38: #{tpu_custom_call.1} parent=31 // pred_check_branch
          %210 = sbr.rel (%p208) target = $region40
        $region39: #{tpu_custom_call.1} parent=31 // pred_region
          %212 = dma.done [#allocation7], 2048
        $region40: #{tpu_custom_call.1} parent=31 // pred_fallthru
          _
        // Predicated region
        $region41: #{tpu_custom_call.1} parent=31 // pred_check
          %p213 = pneg %p98
        $region42: #{tpu_custom_call.1} parent=31 // pred_check_branch
          %215 = sbr.rel (%p213) target = $region44
        $region43: #{tpu_custom_call.1} parent=31 // pred_region
          %217 = dma.done [#allocation7], 2048
        $region44: #{tpu_custom_call.1} parent=31 // pred_fallthru
          _
        %s218 = sand.u32 %s43, 1
        %s219 = scalar_lea.sflag [#allocation4], %s218
        %s220 = sand.u32 %s43, 1
        %s221 = smul.addr %s220, 8
        %s222 = scalar_lea.vmem [#allocation3], %s221
        %p223 = pneg %p56
        %p224 = pneg %p53
        %p225 = pneg %p77
        %p226 = pneg %p74
        %p227 = pneg %p98
        %p228 = pneg %p95
        %p229 = pneg %p124
        %p230 = pneg %p121
        %s231 = sand.u32 %s111, 1
        %s232 = scalar_lea.sflag [#allocation5], %s231
        %s233 = sand.u32 %s111, 1
        %s234 = smul.addr %s233, 8
        %s235 = scalar_lea.vmem [#allocation9], %s234
        %p236 = scmp.eq.s32.totalorder %s26, 0
        // Predicated region
        $region45: #{tpu_custom_call.1} parent=31 // pred_check
          %p237 = pneg %p236
        $region46: #{tpu_custom_call.1} parent=31 // pred_check_branch
          %239 = sbr.rel (%p237) target = $region48
        $region47: #{tpu_custom_call.1} parent=31 // pred_region
          %240 = vst [vmem:[#allocation2] sm:$0xff] 0.0
        $region48: #{tpu_custom_call.1} parent=31 // pred_fallthru
          _
        %s241 = smul.u32 %s26, 128
        %s242 = scalar_lea.vmem [#allocation6], %s241
        %v243 = vld [vmem:[%s242] sm:$0xff]
        %v244 = vld [vmem:[%s242 + $0x8] sm:$0xff]
        %v245 = vld [vmem:[%s242 + $0x10] sm:$0xff]
        %v246 = vld [vmem:[%s242 + $0x18] sm:$0xff]
        %v247 = vld [vmem:[%s242 + $0x20] sm:$0xff]
        %v248 = vld [vmem:[%s242 + $0x28] sm:$0xff]
        %v249 = vld [vmem:[%s242 + $0x30] sm:$0xff]
        %v250 = vld [vmem:[%s242 + $0x38] sm:$0xff]
        %v251 = vld [vmem:[%s242 + $0x40] sm:$0xff]
        %v252 = vld [vmem:[%s242 + $0x48] sm:$0xff]
        %v253 = vld [vmem:[%s242 + $0x50] sm:$0xff]
        %v254 = vld [vmem:[%s242 + $0x58] sm:$0xff]
        %v255 = vld [vmem:[%s242 + $0x60] sm:$0xff]
        %v256 = vld [vmem:[%s242 + $0x68] sm:$0xff]
        %v257 = vld [vmem:[%s242 + $0x70] sm:$0xff]
        %v258 = vld [vmem:[%s242 + $0x78] sm:$0xff]
        %v259 = vld [vmem:[#allocation2] sm:$0xff]
        %v260 = vld [vmem:[%s202] sm:$0xff]
        %261 = vmatpush.msra.mxu0 %v258
        %262 = vmatpush.msra.mxu0 %v257
        %263 = vmatpush.msra.mxu0 %v256
        %264 = vmatpush.msra.mxu0 %v255
        %265 = vmatpush.msra.mxu0 %v254
        %266 = vmatpush.msra.mxu0 %v253
        %267 = vmatpush.msra.mxu0 %v252
        %268 = vmatpush.msra.mxu0 %v251
        %269 = vmatpush.msra.mxu0 %v250
        %270 = vmatpush.msra.mxu0 %v249
        %271 = vmatpush.msra.mxu0 %v248
        %272 = vmatpush.msra.mxu0 %v247
        %273 = vmatpush.msra.mxu0 %v246
        %274 = vmatpush.msra.mxu0 %v245
        %275 = vmatpush.msra.mxu0 %v244
        %276 = vmatpush.msra.mxu0 %v243
        %277 = vmatmul.f32.gmra.mxu0 %v260
        %v278 = vpop.f32.mrf.mxu0
        %v279 = vadd.f32 0.0, %v278
        %280 = vdwg.mxu0
        %v281 = vadd.f32 %v259, %v279
        %282 = vst [vmem:[#allocation2] sm:$0xff] %v281
        // Predicated region
        $region49: #{tpu_custom_call.1} parent=31 // pred_check
          %p283 = pneg %p236
        $region50: #{tpu_custom_call.1} parent=31 // pred_check_branch
          %285 = sbr.rel (%p283) target = $region52
        $region51: #{tpu_custom_call.1} parent=31 // pred_region
          %v286 = vld [vmem:[#allocation2] sm:$0xff]
          %v287 = vld [vmem:[#allocation8] sm:$0xff]
          %v288 = vld [vmem:[#allocation8 + $0x8] sm:$0xff]
          %v289 = vld [vmem:[#allocation8 + $0x10] sm:$0xff]
          %v290 = vld [vmem:[#allocation8 + $0x18] sm:$0xff]
          %v291 = vld [vmem:[#allocation8 + $0x20] sm:$0xff]
          %v292 = vld [vmem:[#allocation8 + $0x28] sm:$0xff]
          %v293 = vld [vmem:[#allocation8 + $0x30] sm:$0xff]
          %v294 = vld [vmem:[#allocation8 + $0x38] sm:$0xff]
          %v295 = vld [vmem:[#allocation8 + $0x40] sm:$0xff]
          %v296 = vld [vmem:[#allocation8 + $0x48] sm:$0xff]
          %v297 = vld [vmem:[#allocation8 + $0x50] sm:$0xff]
          %v298 = vld [vmem:[#allocation8 + $0x58] sm:$0xff]
          %v299 = vld [vmem:[#allocation8 + $0x60] sm:$0xff]
          %v300 = vld [vmem:[#allocation8 + $0x68] sm:$0xff]
          %v301 = vld [vmem:[#allocation8 + $0x70] sm:$0xff]
          %v302 = vld [vmem:[#allocation8 + $0x78] sm:$0xff]
          %303 = vmatpush.msra.mxu0 %v302
          %304 = vmatpush.msra.mxu0 %v301
          %305 = vmatpush.msra.mxu0 %v300
          %306 = vmatpush.msra.mxu0 %v299
          %307 = vmatpush.msra.mxu0 %v298
          %308 = vmatpush.msra.mxu0 %v297
          %309 = vmatpush.msra.mxu0 %v296
          %310 = vmatpush.msra.mxu0 %v295
          %311 = vmatpush.msra.mxu0 %v294
          %312 = vmatpush.msra.mxu0 %v293
          %313 = vmatpush.msra.mxu0 %v292
          %314 = vmatpush.msra.mxu0 %v291
          %315 = vmatpush.msra.mxu0 %v290
          %316 = vmatpush.msra.mxu0 %v289
          %317 = vmatpush.msra.mxu0 %v288
          %318 = vmatpush.msra.mxu0 %v287
          %319 = vmatmul.f32.gmra.mxu0 %v286
          %v320 = vpop.f32.mrf.mxu0
          %v321 = vadd.f32 0.0, %v320
          %322 = vdwg.mxu0
          %323 = vst [vmem:[%s235] sm:$0xff] %v321
        $region52: #{tpu_custom_call.1} parent=31 // pred_fallthru
          _
        %s324 = sand.u32 %s111, 1
        %s325 = scalar_lea.sflag [#allocation5], %s324
        %s326 = sand.u32 %s111, 1
        %s327 = smul.addr %s326, 8
        %s328 = scalar_lea.vmem [#allocation9], %s327
        // Predicated region
        $region53: #{tpu_custom_call.1} parent=31 // pred_check
          %p329 = pneg %p121
        $region54: #{tpu_custom_call.1} parent=31 // pred_check_branch
          %331 = sbr.rel (%p329) target = $region56
        $region55: #{tpu_custom_call.1} parent=31 // pred_region
          %333 = vsyncadd %s325, 0
          %s334 = smul.addr %s25, 8
          %s335 = scalar_lea.hbm %s3, %s334
          %s337 = sshll.u32 %s328, 4
          %s338 = int_to_ptr.vmem [resolvable:$true] %s337
          %s339 = sshll.u32 %s335, 4
          %s340 = int_to_ptr.hbm [resolvable:$true] %s339
          %342 = dma.vmem_to_hbm [thread:$0]  %s338, 128, %s340, %s325
        $region56: #{tpu_custom_call.1} parent=31 // pred_fallthru
          _
      $region32: #{tpu_custom_call.1} parent=5 // pred_fallthru
        _
      %p343 = scmp.le.s32.totalorder 2, %s16
      // Predicated region
      $region57: #{tpu_custom_call.1} parent=5 // pred_check
        %p344 = pneg %p343
      $region58: #{tpu_custom_call.1} parent=5 // pred_check_branch
        %346 = sbr.rel (%p344) target = $region60
      $region59: #{tpu_custom_call.1} parent=5 // pred_region
        %s347 = ssub.s32 %s16, 2
        // Predicated region
        $region61: #{tpu_custom_call.1} parent=59 // pred_check
          %p348 = pneg %p127
        $region62: #{tpu_custom_call.1} parent=59 // pred_check_branch
          %350 = sbr.rel (%p348) target = $region64
        $region63: #{tpu_custom_call.1} parent=59 // pred_region
          %s351 = sand.u32 %s112, 1
          %s352 = scalar_lea.sflag [#allocation5], %s351
          %s353 = sand.u32 %s112, 1
          %s354 = smul.addr %s353, 8
          %s355 = scalar_lea.vmem [#allocation9], %s354
          %357 = dma.done %s352, 128
        $region64: #{tpu_custom_call.1} parent=59 // pred_fallthru
          _
      $region60: #{tpu_custom_call.1} parent=5 // pred_fallthru
        _
    $region6: #{tpu_custom_call.1} parent=1 // loop_footer
      %s20 = sadd.s32 1, %s16
    $region7: #{tpu_custom_call.1} parent=1 // loop_footer_branch
      %15 = sbr.rel target = $region3
    $region8: #{tpu_custom_call.1} parent=1 // loop_exit
      _
    %358 = vsyncpa [#allocation4], 1
    %s359 = scalar_lea.sflag [#allocation4], 1
    %360 = vsyncpa %s359, 1
    %361 = vsyncpa [#allocation7], 1
    %362 = vsyncpa [#allocation5], 1
    %s363 = scalar_lea.sflag [#allocation5], 1
    %364 = vsyncpa %s363, 1

</llo_original>
